<compile_context>
chip_gen: v5e
topology: v5e:2x2
jax: 0.10.0
libtpu: 0.0.40
codegen_flags: <defaults>
</compile_context>

<pallas_src>
import jax
import jax.numpy as jnp
from jax import lax
from jax.experimental import pallas as pl
from jax.experimental.pallas import tpu as pltpu

LANES = 128
SUBLANES = 8
SCALE_BLOCK_ROWS = 256          # rows sharing one noise scalar (1 SMEM f32)

_ARBITRARY = getattr(pltpu, "ARBITRARY", "arbitrary")
_CORE_PARALLEL = getattr(pltpu, "CORE_PARALLEL", "parallel")


def _default_num_cores():
    """2 TensorCores per chip on v7x, 1 on v5e/v6e (and anything unknown)."""
    try:
        kind = jax.devices()[0].device_kind.lower()
    except Exception:
        return 1
    return 2 if "7" in kind else 1


def _make_kernel(scale_block, blocks_per_tile):
    def kernel(scale_smem, params_ref, out_ref):
        """One row-tile of the packed parameter slab.

        scale_smem: (blocks_padded,) f32 SMEM -- one noise scalar per 256-row
                    block (0 on padding blocks), scalar-prefetched.
        params_ref: (tile_rows, 128) native dtype -- packed parameter data.
        out_ref:    (8, 128) f32 -- per-core partial sums; resident across the
                    reduction axis (its index_map ignores l), accumulated
                    in place (no scratch, no epilogue copy).
        """
        c = pl.program_id(0)
        l = pl.program_id(1)

        @pl.when(l == 0)
        def _():
            out_ref[...] = jnp.zeros_like(out_ref)

        base_block = (c * pl.num_programs(1) + l) * blocks_per_tile

        def body(sb, acc):
            s = scale_smem[base_block + sb]              # f32 scalar from SMEM
            start = pl.multiple_of(sb * scale_block, scale_block)
            x = params_ref[pl.ds(start, scale_block), :].astype(jnp.float32)
            # fold 256 rows into the (8,128) accumulator with VPU adds only;
            # temporaries stay bounded to ~32 vregs per iteration.
            return acc + (x * s).reshape(-1, SUBLANES, LANES).sum(axis=0)

        acc0 = jnp.zeros((SUBLANES, LANES), jnp.float32)
        out_ref[...] += lax.fori_loop(0, blocks_per_tile, body, acc0)

    return kernel


def pack_params(params, *, tile_rows=8192, num_cores=None):
    """One-time packing of parameter tensors into a lane-dense slab.

    Each parameter is padded to SCALE_BLOCK-row granularity so every 256-row
    block maps to exactly one parameter (one noise scalar).

    Returns (slab, block_param, meta):
      slab:        (rows, 128) in the params' native dtype (f32 if mixed)
      block_param: (blocks,) int32, index of the parameter owning each 256-row
                   block (== len(params) for zero-padding blocks)
      meta:        static tiling info for the kernel call
    """
    if num_cores is None:
        num_cores = _default_num_cores()
    num_cores = max(1, int(num_cores))

    flats = [jnp.ravel(p) for p in params]
    if not flats:
        flats = [jnp.zeros((0,), jnp.float32)]
    dtypes = {f.dtype for f in flats}
    dtype = flats[0].dtype if len(dtypes) == 1 else jnp.float32
    flats = [f.astype(dtype) for f in flats]

    itemsize = jnp.dtype(dtype).itemsize
    row_gran = SUBLANES * max(1, 4 // itemsize)      # 8 f32 / 16 bf16 / 32 i8
    scale_block = max(SCALE_BLOCK_ROWS, row_gran)
    blk_elems = scale_block * LANES

    blocks_per = [-(-int(f.shape[0]) // blk_elems) if int(f.shape[0]) else 0
                  for f in flats]
    total_blocks = max(1, sum(blocks_per))

    # Tile = whole number of scale blocks; biggest tile that fits the per-core
    # work.  8192 f32 rows = 4 MiB/tile (8 MiB double-buffered) -- fits every
    # generation's scoped VMEM now that the scale lives in SMEM.
    tile_blocks = max(1, int(tile_rows) // scale_block)
    blocks_per_core = -(-total_blocks // num_cores)
    tile_blocks = min(tile_blocks, blocks_per_core)
    tiles_per_core = -(-blocks_per_core // tile_blocks)
    blocks_padded = num_cores * tiles_per_core * tile_blocks
    rows_padded = blocks_padded * scale_block

    chunks, block_param = [], []
    for i, (f, b) in enumerate(zip(flats, blocks_per)):
        if b == 0:
            continue
        chunks.append(jnp.pad(f, (0, b * blk_elems - int(f.shape[0]))))
        block_param.extend([i] * b)
    tail = blocks_padded - len(block_param)
    if tail:
        chunks.append(jnp.zeros((tail * blk_elems,), dtype))
        block_param.extend([len(params)] * tail)

    slab = jnp.concatenate(chunks).reshape(rows_padded, LANES)
    block_param = jnp.asarray(block_param, jnp.int32)
    meta = dict(tile_rows=tile_blocks * scale_block,
                tiles_per_core=tiles_per_core,
                num_cores=num_cores,
                scale_block=scale_block,
                rows=rows_padded)
    return slab, block_param, meta


def noise_loss_packed(slab, block_param, noise, observed, meta):
    tile_rows = meta["tile_rows"]
    tiles_per_core = meta["tiles_per_core"]
    num_cores = meta["num_cores"]
    scale_block = meta["scale_block"]
    blocks_per_tile = tile_rows // scale_block

    # Per-block noise scale (f32, goes to SMEM via scalar prefetch); padding
    # blocks (block_param == P) pick the appended 0.
    noise_ext = jnp.concatenate(
        [noise.astype(jnp.float32), jnp.zeros((1,), jnp.float32)])
    block_scale = noise_ext[block_param]                 # (blocks_padded,) f32

    tile_bytes = tile_rows * LANES * jnp.dtype(slab.dtype).itemsize
    vmem_limit = int(min(48 * 2**20, max(32 * 2**20, 4 * tile_bytes)))
    cost = pl.CostEstimate(
        flops=2 * int(slab.shape[0]) * LANES,
        transcendentals=0,
        bytes_accessed=int(slab.size) * jnp.dtype(slab.dtype).itemsize
        + int(block_scale.size) * 4 + num_cores * SUBLANES * LANES * 4)

    kernel = _make_kernel(scale_block, blocks_per_tile)

    def run(core_parallel, n_buffers):
        spec_kwargs = {}
        if n_buffers != 2:
            spec_kwargs["pipeline_mode"] = pl.Buffered(n_buffers)
        params_spec = pl.BlockSpec(
            (tile_rows, LANES),
            lambda c, l, s: (c * tiles_per_core + l, 0),
            **spec_kwargs)
        sem0 = _CORE_PARALLEL if core_parallel else _ARBITRARY
        return pl.pallas_call(
            kernel,
            out_shape=jax.ShapeDtypeStruct((num_cores, SUBLANES, LANES),
                                           jnp.float32),
            grid_spec=pltpu.PrefetchScalarGridSpec(
                num_scalar_prefetch=1,
                grid=(num_cores, tiles_per_core),
                in_specs=[params_spec],
                out_specs=pl.BlockSpec((None, SUBLANES, LANES),
                                       lambda c, l, s: (c, 0, 0)),
            ),
            compiler_params=pltpu.CompilerParams(
                dimension_semantics=(sem0, _ARBITRARY),
                vmem_limit_bytes=vmem_limit),
            cost_estimate=cost,
        )(block_scale, slab)

    if num_cores > 1:
        try:
            # v7x path: real 2-TC sharding + deeper input buffering.
            partials = run(core_parallel=True, n_buffers=3)
        except Exception:
            # Fallback: same packing, plain sequential grid.
            partials = run(core_parallel=False, n_buffers=2)
    else:
        partials = run(core_parallel=False, n_buffers=2)

    # single cheap cross-lane/sublane reduce over (num_cores, 8, 128) partials
    return jnp.sum(partials) / jnp.asarray(observed, jnp.float32)


def noise_loss(params, noise, observed, *, tile_rows=8192, num_cores=None):
    """Convenience wrapper: pack (one-time cost) + fused reduction kernel."""
    slab, block_param, meta = pack_params(
        params, tile_rows=tile_rows, num_cores=num_cores)
    return noise_loss_packed(slab, block_param, noise, observed, meta)


if __name__ == "__main__":
    key = jax.random.PRNGKey(0)
    k1, k2, k3, kn = jax.random.split(key, 4)

    noise_std = 0.1
    observed = 50.0

    # Deterministic synthetic "model parameters" (the module just iterates over
    # whatever parameter tensors it is given).
    params = [
        jax.random.normal(k1, (4, 4, 3, 3), jnp.float32),       # conv weight (OIHW)
        jax.random.normal(k2, (4,), jnp.float32),                # conv bias
        jax.random.normal(k3, (32, 4 * 16 * 16), jnp.float32),   # linear weight
    ]
    # One scalar noise draw per parameter (== noise_std * torch.randn(1) per var).
    # TODO(synk): the RNG draw itself stays JAX-side (like torch's host RNG);
    # only the heavy scaled sum-reduction is in the Pallas kernel.
    noise = noise_std * jax.random.normal(kn, (len(params),), jnp.float32)

    result = noise_loss(params, noise, observed)
    result = jax.block_until_ready(result)

    # Pure-JAX reference for the same noise draws.
    ref = sum(noise[i] * jnp.sum(params[i]) for i in range(len(params))) / observed
    assert jnp.allclose(result, ref, rtol=1e-5, atol=1e-5), (result, ref)

    print("KERNEL_OK")
</pallas_src>

<mosaic_0001>
module attributes {stable_mosaic.version = 11 : i64} {
  func.func @kernel(%arg0: i32, %arg1: i32, %arg2: memref<3xf32, #tpu.memory_space<smem>>, %arg3: memref<768x128xf32, #tpu.memory_space<vmem>>, %arg4: memref<1x8x128xf32, #tpu.memory_space<vmem>>) attributes {dimension_semantics = [#tpu.dimension_semantics<arbitrary>, #tpu.dimension_semantics<arbitrary>], iteration_bounds = array<i64: 1, 1>, scalar_prefetch = 1 : i64, scratch_operands = 0 : i64, tpu.core_type = #tpu.core_type<tc>, window_params = [{transform_indices = @transform_0, window_bounds = array<i64: 768, 128>}, {transform_indices = @transform_1, window_bounds = array<i64: 1, 8, 128>}]} {
    %c0_i32 = arith.constant 0 : i32
    %0 = arith.cmpi eq, %arg1, %c0_i32 : i32
    %1 = arith.extui %0 : i1 to i32
    %c0_i32_0 = arith.constant 0 : i32
    %2 = arith.cmpi ne, %1, %c0_i32_0 : i32
    scf.if %2 {
      %cst_10 = arith.constant 0.000000e+00 : f32
      %15 = vector.broadcast %cst_10 : f32 to vector<8x128xf32>
      %c0_11 = arith.constant 0 : index
      %c0_12 = arith.constant 0 : index
      %c0_13 = arith.constant 0 : index
      %16 = vector.load %arg4[%c0_11, %c0_12, %c0_13] : memref<1x8x128xf32, #tpu.memory_space<vmem>>, vector<1x8x128xf32>
      %17 = vector.shape_cast %16 : vector<1x8x128xf32> to vector<8x128xf32>
      %18 = vector.shape_cast %15 : vector<8x128xf32> to vector<1x8x128xf32>
      tpu.vector_store %arg4[%c0_11, %c0_12, %c0_13], %18 {strides = array<i32>} : memref<1x8x128xf32, #tpu.memory_space<vmem>>, vector<1x8x128xf32>,
    } else {
    }
    %c1_i32 = arith.constant 1 : i32
    %3 = arith.muli %arg0, %c1_i32 : i32
    %4 = arith.addi %3, %arg1 : i32
    %c3_i32 = arith.constant 3 : i32
    %5 = arith.muli %4, %c3_i32 : i32
    %cst = arith.constant 0.000000e+00 : f32
    %6 = vector.broadcast %cst : f32 to vector<8x128xf32>
    %c0 = arith.constant 0 : index
    %c0_1 = arith.constant 0 : index
    %c0_2 = arith.constant 0 : index
    %7 = vector.load %arg4[%c0, %c0_1, %c0_2] : memref<1x8x128xf32, #tpu.memory_space<vmem>>, vector<1x8x128xf32>
    %8 = vector.shape_cast %7 : vector<1x8x128xf32> to vector<8x128xf32>
    %c0_i32_3 = arith.constant 0 : i32
    %c3_i32_4 = arith.constant 3 : i32
    %9 = arith.addi %c0_i32_3, %c3_i32_4 : i32
    %c1_i32_5 = arith.constant 1 : i32
    %10 = scf.for %arg5 = %c0_i32_3 to %9 step %c1_i32_5 iter_args(%arg6 = %6) -> (vector<8x128xf32>)  : i32 {
      %15 = arith.addi %5, %arg5 : i32
      %16 = arith.index_cast %15 : i32 to index
      %17 = memref.load %arg2[%16] : memref<3xf32, #tpu.memory_space<smem>>
      %c256_i32 = arith.constant 256 : i32
      %18 = arith.muli %arg5, %c256_i32 : i32
      %19 = tpu.assume_multiple %18, 256 : i32
      %20 = arith.index_cast %19 : i32 to index
      %c0_10 = arith.constant 0 : index
      %21 = vector.load %arg3[%20, %c0_10] : memref<768x128xf32, #tpu.memory_space<vmem>>, vector<256x128xf32>
      %22 = vector.broadcast %17 : f32 to vector<256x128xf32>
      %23 = arith.mulf %21, %22 : vector<256x128xf32>
      %24 = vector.shape_cast %23 : vector<256x128xf32> to vector<32x8x128xf32>
      %cst_11 = arith.constant dense<0.000000e+00> : vector<8x128xf32>
      %25 = vector.multi_reduction <add>, %24, %cst_11 [0] : vector<32x8x128xf32> to vector<8x128xf32>
      %26 = arith.addf %arg6, %25 : vector<8x128xf32>
      scf.yield %26 : vector<8x128xf32>
    }
    %c3_i32_6 = arith.constant 3 : i32
    %11 = arith.addf %8, %10 : vector<8x128xf32>
    %c0_7 = arith.constant 0 : index
    %c0_8 = arith.constant 0 : index
    %c0_9 = arith.constant 0 : index
    %12 = vector.load %arg4[%c0_7, %c0_8, %c0_9] : memref<1x8x128xf32, #tpu.memory_space<vmem>>, vector<1x8x128xf32>
    %13 = vector.shape_cast %12 : vector<1x8x128xf32> to vector<8x128xf32>
    %14 = vector.shape_cast %11 : vector<8x128xf32> to vector<1x8x128xf32>
    tpu.vector_store %arg4[%c0_7, %c0_8, %c0_9], %14 {strides = array<i32>} : memref<1x8x128xf32, #tpu.memory_space<vmem>>, vector<1x8x128xf32>,
    return
  }
  func.func @transform_0(%arg0: i32, %arg1: i32, %arg2: memref<3xf32, #tpu.memory_space<smem>>) -> (i32, i32) {
    %c1_i32 = arith.constant 1 : i32
    %0 = arith.muli %arg0, %c1_i32 : i32
    %1 = arith.addi %0, %arg1 : i32
    %c0_i32 = arith.constant 0 : i32
    %c0_i32_0 = arith.constant 0 : i32
    return %1, %c0_i32 : i32, i32
  }
  func.func @transform_1(%arg0: i32, %arg1: i32, %arg2: memref<3xf32, #tpu.memory_space<smem>>) -> (i32, i32, i32) {
    %c0_i32 = arith.constant 0 : i32
    %c0_i32_0 = arith.constant 0 : i32
    %c0_i32_1 = arith.constant 0 : i32
    return %arg0, %c0_i32, %c0_i32_0 : i32, i32, i32
  }
}

</mosaic_0001>

<llo_original>
// kernel: tpu_custom_call.1
$region0: #{tpu_custom_call.1}
  #allocation0 [shape = 'u32[]', space=smem, size = 0x4, offset = 0x4, fixed_abs, tag = 'smem constant byte address 0x4 - core index']
  #allocation1 [shape = 'u32[72,128]{1,0:T(1,128)}', space=vmem, size = 0x9000, scoped, tag = 'internal scratch']
  #allocation2 [shape = 's32[1]{0}', space=sflag, size = 0x4, scoped, tag = 'scoped memory for tpu_custom_call.1']
  #allocation3 [shape = 'u8[512]{0}', space=smem, size = 0x200, scoped, tag = 'prefetched SMEM operand 0']
  %s0 = inlined_call_operand.hbm [shape: f32[3], index: 0, kind: input, shape index: {}]
  %s1 = inlined_call_operand.hbm [shape: f32[768,128], index: 1, kind: input, shape index: {}]
  %s2 = inlined_call_operand.hbm [shape: f32[1,8,128], index: 2, kind: output, shape index: {}]
  %s3 = sld [smem:[#allocation0]]
  $region29: #{tpu_custom_call.1} parent=0
    _
  %s5 = ssub.s32 1, %s3
  %s6 = scalar_select 0, %s5, %s3
  %s8 = sshll.u32 %s0, 4
  %s9 = int_to_ptr.hbm [resolvable:$true] %s8
  %11 = dma.hbm_to_smem %s9, 16, [#allocation3], [#allocation2]
  %13 = dma.done [#allocation2], 16
  %14 = sfence
  $region1: #{tpu_custom_call.1} parent=0
    #allocation4 [shape = 'u8[393216]{0}', space=vmem, size = 0x60000, scoped, tag = 'input window, operand 1, single buffered']
    #allocation5 [shape = 's32[1]{0}', space=sflag, size = 0x4, scoped, tag = 'scoped memory for tpu_custom_call.1']
    #allocation6 [shape = 's32[1]{0}', space=sflag, size = 0x4, scoped, tag = 'scoped memory for tpu_custom_call.1']
    #allocation7 [shape = 'u8[4096]{0}', space=vmem, size = 0x1000, scoped, tag = 'output window, operand 0, single buffered']
    %15 = vsyncpa [#allocation5], 0
    %16 = vsyncpa [#allocation6], 0
    // Predicated region
    $region2: #{tpu_custom_call.1} parent=1 // pred_check
      _
    $region3: #{tpu_custom_call.1} parent=1 // pred_check_branch
      %18 = sbr.rel (0) target = $region5
    $region4: #{tpu_custom_call.1} parent=1 // pred_region
      %s19 = sadd.s32 0, 0
      %s20 = smul.u32 96, %s19
      %22 = vsyncadd [#allocation5], 0
      %s23 = smul.addr %s20, 8
      %s24 = scalar_lea.hbm %s1, %s23
      %s25 = sshll.u32 %s24, 4
      %s26 = int_to_ptr.hbm [resolvable:$true] %s25
      %s27 = sshll.u32 [#allocation4], 4
      %s28 = int_to_ptr.vmem [resolvable:$true] %s27
      %33 = dma.hbm_to_vmem [thread:$0]  %s26, 12288, %s28, [#allocation5], 128, 128, 8
    $region5: #{tpu_custom_call.1} parent=1 // pred_fallthru
      _
    // Predicated region
    $region6: #{tpu_custom_call.1} parent=1 // pred_check
      _
    $region7: #{tpu_custom_call.1} parent=1 // pred_check_branch
      %35 = sbr.rel (0) target = $region9
    $region8: #{tpu_custom_call.1} parent=1 // pred_region
      %37 = dma.done [#allocation5], 12288
    $region9: #{tpu_custom_call.1} parent=1 // pred_fallthru
      _
    %s38 = sadd.s32 0, 0
    %s39 = smul.u32 96, %s38
    %p40 = scmp.eq.s32.totalorder 0, 0
    // Predicated region
    $region10: #{tpu_custom_call.1} parent=1 // pred_check
      %p41 = pneg %p40
    $region11: #{tpu_custom_call.1} parent=1 // pred_check_branch
      %43 = sbr.rel (%p41) target = $region13
    $region12: #{tpu_custom_call.1} parent=1 // pred_region
      %44 = vst [vmem:[#allocation7] sm:$0xff] 0.0
    $region13: #{tpu_custom_call.1} parent=1 // pred_fallthru
      _
    %s45 = sadd.s32 0, 0
    %s46 = smul.u32 %s45, 3
    %v47 = vld [vmem:[#allocation7] sm:$0xff]
    loop: start=0, step=1, limit=3
    $region14: #{tpu_custom_call.1} parent=1 // loop_pre_header
      _
    $region15: #{tpu_custom_call.1} parent=1 // loop_header
      %s49 = sphi 0, %s53
      %p50 = scmp.ge.s32.totalorder %s49, 3
      %v54 = vphi 0.0, %v155
    $region16: #{tpu_custom_call.1} parent=1 // loop_header_branch
      %52 = sbr.rel (%p50) target = $region20
    $region17: #{tpu_custom_call.1} parent=1 // loop_body
      %s55 = sadd.s32 %s46, %s49
      %s56 = sld [smem:[#allocation3 + %s55]]
      %s57 = smul.u32 %s49, 256
      %s58 = scalar_lea.vmem [#allocation4], %s57
      %v59 = vld [vmem:[%s58] sm:$0xff]
      %v60 = vld [vmem:[%s58 + $0x8] sm:$0xff]
      %v61 = vld [vmem:[%s58 + $0x10] sm:$0xff]
      %v62 = vld [vmem:[%s58 + $0x18] sm:$0xff]
      %v63 = vld [vmem:[%s58 + $0x20] sm:$0xff]
      %v64 = vld [vmem:[%s58 + $0x28] sm:$0xff]
      %v65 = vld [vmem:[%s58 + $0x30] sm:$0xff]
      %v66 = vld [vmem:[%s58 + $0x38] sm:$0xff]
      %v67 = vld [vmem:[%s58 + $0x40] sm:$0xff]
      %v68 = vld [vmem:[%s58 + $0x48] sm:$0xff]
      %v69 = vld [vmem:[%s58 + $0x50] sm:$0xff]
      %v70 = vld [vmem:[%s58 + $0x58] sm:$0xff]
      %v71 = vld [vmem:[%s58 + $0x60] sm:$0xff]
      %v72 = vld [vmem:[%s58 + $0x68] sm:$0xff]
      %v73 = vld [vmem:[%s58 + $0x70] sm:$0xff]
      %v74 = vld [vmem:[%s58 + $0x78] sm:$0xff]
      %v75 = vld [vmem:[%s58 + $0x80] sm:$0xff]
      %v76 = vld [vmem:[%s58 + $0x88] sm:$0xff]
      %v77 = vld [vmem:[%s58 + $0x90] sm:$0xff]
      %v78 = vld [vmem:[%s58 + $0x98] sm:$0xff]
      %v79 = vld [vmem:[%s58 + $0xa0] sm:$0xff]
      %v80 = vld [vmem:[%s58 + $0xa8] sm:$0xff]
      %v81 = vld [vmem:[%s58 + $0xb0] sm:$0xff]
      %v82 = vld [vmem:[%s58 + $0xb8] sm:$0xff]
      %v83 = vld [vmem:[%s58 + $0xc0] sm:$0xff]
      %v84 = vld [vmem:[%s58 + $0xc8] sm:$0xff]
      %v85 = vld [vmem:[%s58 + $0xd0] sm:$0xff]
      %v86 = vld [vmem:[%s58 + $0xd8] sm:$0xff]
      %v87 = vld [vmem:[%s58 + $0xe0] sm:$0xff]
      %v88 = vld [vmem:[%s58 + $0xe8] sm:$0xff]
      %v89 = vld [vmem:[%s58 + $0xf0] sm:$0xff]
      %v90 = vld [vmem:[%s58 + $0xf8] sm:$0xff]
      %v91 = vstv %s56
      %v92 = vmul.f32 %v59, %v91
      %v93 = vmul.f32 %v60, %v91
      %v94 = vmul.f32 %v61, %v91
      %v95 = vmul.f32 %v62, %v91
      %v96 = vmul.f32 %v63, %v91
      %v97 = vmul.f32 %v64, %v91
      %v98 = vmul.f32 %v65, %v91
      %v99 = vmul.f32 %v66, %v91
      %v100 = vmul.f32 %v67, %v91
      %v101 = vmul.f32 %v68, %v91
      %v102 = vmul.f32 %v69, %v91
      %v103 = vmul.f32 %v70, %v91
      %v104 = vmul.f32 %v71, %v91
      %v105 = vmul.f32 %v72, %v91
      %v106 = vmul.f32 %v73, %v91
      %v107 = vmul.f32 %v74, %v91
      %v108 = vmul.f32 %v75, %v91
      %v109 = vmul.f32 %v76, %v91
      %v110 = vmul.f32 %v77, %v91
      %v111 = vmul.f32 %v78, %v91
      %v112 = vmul.f32 %v79, %v91
      %v113 = vmul.f32 %v80, %v91
      %v114 = vmul.f32 %v81, %v91
      %v115 = vmul.f32 %v82, %v91
      %v116 = vmul.f32 %v83, %v91
      %v117 = vmul.f32 %v84, %v91
      %v118 = vmul.f32 %v85, %v91
      %v119 = vmul.f32 %v86, %v91
      %v120 = vmul.f32 %v87, %v91
      %v121 = vmul.f32 %v88, %v91
      %v122 = vmul.f32 %v89, %v91
      %v123 = vmul.f32 %v90, %v91
      %v124 = vadd.f32 %v92, %v93
      %v125 = vadd.f32 %v124, %v94
      %v126 = vadd.f32 %v125, %v95
      %v127 = vadd.f32 %v126, %v96
      %v128 = vadd.f32 %v127, %v97
      %v129 = vadd.f32 %v128, %v98
      %v130 = vadd.f32 %v129, %v99
      %v131 = vadd.f32 %v130, %v100
      %v132 = vadd.f32 %v131, %v101
      %v133 = vadd.f32 %v132, %v102
      %v134 = vadd.f32 %v133, %v103
      %v135 = vadd.f32 %v134, %v104
      %v136 = vadd.f32 %v135, %v105
      %v137 = vadd.f32 %v136, %v106
      %v138 = vadd.f32 %v137, %v107
      %v139 = vadd.f32 %v138, %v108
      %v140 = vadd.f32 %v139, %v109
      %v141 = vadd.f32 %v140, %v110
      %v142 = vadd.f32 %v141, %v111
      %v143 = vadd.f32 %v142, %v112
      %v144 = vadd.f32 %v143, %v113
      %v145 = vadd.f32 %v144, %v114
      %v146 = vadd.f32 %v145, %v115
      %v147 = vadd.f32 %v146, %v116
      %v148 = vadd.f32 %v147, %v117
      %v149 = vadd.f32 %v148, %v118
      %v150 = vadd.f32 %v149, %v119
      %v151 = vadd.f32 %v150, %v120
      %v152 = vadd.f32 %v151, %v121
      %v153 = vadd.f32 %v152, %v122
      %v154 = vadd.f32 %v153, %v123
      %v155 = vadd.f32 %v54, %v154
    $region18: #{tpu_custom_call.1} parent=1 // loop_footer
      %s53 = sadd.s32 1, %s49
    $region19: #{tpu_custom_call.1} parent=1 // loop_footer_branch
      %48 = sbr.rel target = $region15
    $region20: #{tpu_custom_call.1} parent=1 // loop_exit
      _
    %v156 = vadd.f32 %v47, %v54
    %157 = vst [vmem:[#allocation7] sm:$0xff] %v156
    // Predicated region
    $region21: #{tpu_custom_call.1} parent=1 // pred_check
      _
    $region22: #{tpu_custom_call.1} parent=1 // pred_check_branch
      %159 = sbr.rel (0) target = $region24
    $region23: #{tpu_custom_call.1} parent=1 // pred_region
      %161 = vsyncadd [#allocation6], 0
      %s163 = sshll.u32 [#allocation7], 4
      %s164 = int_to_ptr.vmem [resolvable:$true] %s163
      %s165 = sshll.u32 %s2, 4
      %s166 = int_to_ptr.hbm [resolvable:$true] %s165
      %168 = dma.vmem_to_hbm [thread:$0]  %s164, 128, %s166, [#allocation6]
    $region24: #{tpu_custom_call.1} parent=1 // pred_fallthru
      _
    // Predicated region
    $region25: #{tpu_custom_call.1} parent=1 // pred_check
      _
    $region26: #{tpu_custom_call.1} parent=1 // pred_check_branch
      %170 = sbr.rel (0) target = $region28
    $region27: #{tpu_custom_call.1} parent=1 // pred_region
      %172 = dma.done [#allocation6], 128
    $region28: #{tpu_custom_call.1} parent=1 // pred_fallthru
      _
    %173 = vsyncpa [#allocation5], 1
    %174 = vsyncpa [#allocation6], 1

</llo_original>
